<compile_context>
chip_gen: v5e
topology: v5e:2x2
jax: 0.10.0
libtpu: 0.0.40
codegen_flags: <defaults>
</compile_context>

<pallas_src>
import functools

import jax
import jax.numpy as jnp
from jax.experimental import pallas as pl
from jax.experimental.pallas import tpu as pltpu

HIDDEN = 100        # logical hidden width (PyTorch module)
HIDDEN_PAD = 128    # lane-aligned padded width used inside the kernel
LANE = 128          # TPU lane width; batch is the lane axis in this kernel


def _round_up(x, m):
    return ((x + m - 1) // m) * m


def _cdiv(a, b):
    return -(-a // b)


def _qfunc_kernel(obs_ref, act_ref, w1o_ref, w1a_ref, b1_ref,
                  w2_ref, b2_ref, w3_ref, b3_ref, o_ref, *, compute_dtype):
    cdt = compute_dtype
    # Layer 1 (fused concat, feature-major): (128,od)@(od,TB) + (128,ad)@(ad,TB).
    z1 = (jnp.dot(w1o_ref[...], obs_ref[...].astype(cdt),
                  preferred_element_type=jnp.float32)
          + jnp.dot(w1a_ref[...], act_ref[...].astype(cdt),
                    preferred_element_type=jnp.float32)
          + b1_ref[...])                                   # (128, TB) f32
    h1 = jnp.tanh(z1.astype(cdt))                          # bf16 tanh on v6e/v7x
    # Layer 2: lane-dense 128x128 matmul, f32 accumulate.
    z2 = jnp.dot(w2_ref[...], h1,
                 preferred_element_type=jnp.float32) + b2_ref[...]
    h2 = jnp.tanh(z2.astype(cdt))                          # (128, TB)
    # Layer 3 (128 -> 1): single-row matmul -> lane-dense (1, TB) result.
    out = jnp.dot(w3_ref[...], h2,
                  preferred_element_type=jnp.float32) + b3_ref[0, 0]
    o_ref[...] = out.astype(o_ref.dtype)


def _choose_batch_tiling(B):
    """Few, large, lane-aligned batch tiles (per-grid-step overhead dominates)."""
    n_tiles = max(1, _cdiv(B, 1024))
    if B >= 2 * LANE:
        # Guarantee an even number of >= 2 grid steps so both v7x TensorCores
        # get a lane-dense tile (harmless on single-core v5e/v6e).
        n_tiles = max(2, n_tiles)
        if n_tiles % 2:
            n_tiles += 1
    tb = _round_up(_cdiv(B, n_tiles), LANE)
    return n_tiles, tb


@jax.jit
def q_value(observations, actions, params):
    """Equivalent of QFunction.Q_value(obs, act) -> [B, 1] float32."""
    w1o, w1a, b1, w2, b2, w3, b3 = params
    B, obs_dim = observations.shape
    act_dim = actions.shape[1]
    H = w2.shape[0]                      # = HIDDEN_PAD
    compute_dtype = w2.dtype             # f32 (v5e) or bf16 (v6e/v7x)

    n_tiles, TB = _choose_batch_tiling(B)
    Bp = n_tiles * TB
    if Bp != B:
        pad = Bp - B
        observations = jnp.pad(observations, ((0, pad), (0, 0)))
        actions = jnp.pad(actions, ((0, pad), (0, 0)))

    # Feature-major: batch becomes the lane/contiguous axis. Tiny XLA
    # transposes in the wrapper; inputs stay f32 (cast in-kernel if bf16).
    obs_t = observations.T               # (obs_dim, Bp)
    act_t = actions.T                    # (act_dim, Bp)

    # Weights: full-array blocks whose block index never changes -> resident.
    resident = lambda a: pl.BlockSpec(a.shape, lambda i: (0,) * a.ndim)

    flops = 2 * Bp * (obs_dim + act_dim) * H + 2 * Bp * H * H + 2 * Bp * H
    bytes_accessed = 4 * (
        Bp * (obs_dim + act_dim)                        # activations in
        + (obs_dim + act_dim) * H + H * H + 3 * H + 1   # weights + biases
        + Bp                                            # output
    )

    out = pl.pallas_call(
        functools.partial(_qfunc_kernel, compute_dtype=compute_dtype),
        out_shape=jax.ShapeDtypeStruct((1, Bp), jnp.float32),
        grid=(n_tiles,),
        in_specs=[
            pl.BlockSpec((obs_dim, TB), lambda i: (0, i)),   # obs^T tile
            pl.BlockSpec((act_dim, TB), lambda i: (0, i)),   # act^T tile
            resident(w1o), resident(w1a), resident(b1),
            resident(w2), resident(b2), resident(w3),
            pl.BlockSpec(memory_space=pltpu.MemorySpace.SMEM),  # b3 scalar
        ],
        out_specs=pl.BlockSpec((1, TB), lambda i: (0, i)),   # lane-dense row
        compiler_params=pltpu.CompilerParams(
            dimension_semantics=("parallel",)),              # 2 TCs on v7x
        cost_estimate=pl.CostEstimate(
            flops=flops,
            transcendentals=2 * Bp * H,
            bytes_accessed=bytes_accessed),
    )(obs_t, act_t, w1o, w1a, b1, w2, b2, w3, b3)
    return out.reshape(-1, 1)[:B]


def _default_compute_dtype():
    """bf16 weights/activations/tanh on bf16-capable chips (v6e/v7x), else f32."""
    try:
        kind = jax.devices()[0].device_kind.lower()
    except Exception:
        return jnp.float32
    if ("v6" in kind) or ("v7" in kind) or ("7x" in kind):
        return jnp.bfloat16
    return jnp.float32


def init_params(key, obs_dim, act_dim, hidden=HIDDEN, hidden_pad=HIDDEN_PAD,
                dtype=jnp.float32):
    """torch.nn.Linear-style init (U[-1/sqrt(fan_in), 1/sqrt(fan_in)]).

    Weights stored feature-major (out, in) for the transposed kernel; W1 split
    into obs/act halves (concat fused in-kernel); hidden dim zero-padded to
    `hidden_pad`; weights cast to `dtype`, biases kept f32."""
    in_dim = obs_dim + act_dim
    k1w, k1b, k2w, k2b, k3w, k3b = jax.random.split(key, 6)

    def unif(k, shape, fan_in):
        bound = float(1.0 / (fan_in ** 0.5))
        return jax.random.uniform(k, shape, jnp.float32, -bound, bound)

    w1 = unif(k1w, (in_dim, hidden), in_dim)
    b1 = unif(k1b, (1, hidden), in_dim)
    w2 = unif(k2w, (hidden, hidden), hidden)
    b2 = unif(k2b, (1, hidden), hidden)
    w3 = unif(k3w, (hidden, 1), hidden)
    b3 = unif(k3b, (1, 1), hidden)

    ph = hidden_pad - hidden
    pad_cols = lambda a: jnp.pad(a, ((0, 0), (0, ph)))

    w1o_t = pad_cols(w1[:obs_dim]).T.astype(dtype)         # (128, obs_dim)
    w1a_t = pad_cols(w1[obs_dim:]).T.astype(dtype)         # (128, act_dim)
    b1_t = pad_cols(b1).T                                   # (128, 1) f32
    w2_t = jnp.pad(w2, ((0, ph), (0, ph))).T.astype(dtype)  # (128, 128)
    b2_t = pad_cols(b2).T                                   # (128, 1) f32
    w3_r = pad_cols(w3.T).astype(dtype)                     # (1, 128)
    return (w1o_t, w1a_t, b1_t, w2_t, b2_t, w3_r, b3)


def _reference_forward(obs, act, params):
    """Pure-JAX f32 reference using the standard concat + dense matmul path."""
    w1o_t, w1a_t, b1, w2_t, b2, w3_r, b3 = params
    f32 = jnp.float32
    x = jnp.concatenate([obs, act], axis=-1)
    w1 = jnp.concatenate([w1o_t, w1a_t], axis=1).astype(f32).T   # (in, 128)
    h1 = jnp.tanh(x @ w1 + b1.reshape(1, -1))
    h2 = jnp.tanh(h1 @ w2_t.astype(f32).T + b2.reshape(1, -1))
    return h2 @ w3_r.astype(f32).T + b3


# TODO(synk): QFunction.fit (Adam optimizer step + SmoothL1Loss backward) is a
# training routine, not part of the forward pass, and is not translated here.

if __name__ == "__main__":
    key = jax.random.PRNGKey(0)
    obs_dim, act_dim, batch = 12, 4, 8

    compute_dtype = _default_compute_dtype()
    kp, ko, ka = jax.random.split(key, 3)
    params = init_params(kp, obs_dim, act_dim, dtype=compute_dtype)
    observations = jax.random.normal(ko, (batch, obs_dim), jnp.float32)
    actions = jax.random.normal(ka, (batch, act_dim), jnp.float32)

    q = q_value(observations, actions, params)
    q = jax.block_until_ready(q)

    ref = _reference_forward(observations, actions, params)
    assert q.shape == (batch, 1)
    if compute_dtype == jnp.float32:
        atol, rtol = 2e-5, 1e-5
    else:  # bf16 tanh/activation path on v6e/v7x vs f32 reference
        atol, rtol = 5e-2, 5e-2
    assert jnp.allclose(q, ref, atol=atol, rtol=rtol), (
        float(jnp.max(jnp.abs(q - ref))))

    print("KERNEL_OK")
</pallas_src>

<mosaic_0001>
module attributes {stable_mosaic.version = 11 : i64} {
  func.func @_qfunc_kernel(%arg0: i32, %arg1: memref<12x128xf32, #tpu.memory_space<vmem>>, %arg2: memref<4x128xf32, #tpu.memory_space<vmem>>, %arg3: memref<128x12xf32, #tpu.memory_space<vmem>>, %arg4: memref<128x4xf32, #tpu.memory_space<vmem>>, %arg5: memref<128x1xf32, #tpu.memory_space<vmem>>, %arg6: memref<128x128xf32, #tpu.memory_space<vmem>>, %arg7: memref<128x1xf32, #tpu.memory_space<vmem>>, %arg8: memref<1x128xf32, #tpu.memory_space<vmem>>, %arg9: memref<1x1xf32, #tpu.memory_space<smem>>, %arg10: memref<1x128xf32, #tpu.memory_space<vmem>>) attributes {dimension_semantics = [#tpu.dimension_semantics<parallel>], iteration_bounds = array<i64: 1>, scalar_prefetch = 0 : i64, scratch_operands = 0 : i64, tpu.core_type = #tpu.core_type<tc>, window_params = [{transform_indices = @transform_0, window_bounds = array<i64: 12, 128>}, {transform_indices = @transform_1, window_bounds = array<i64: 4, 128>}, {pipeline_mode = #tpu.pipeline_mode<synchronous>, transform_indices = @transform_2, window_bounds = array<i64: 128, 12>}, {pipeline_mode = #tpu.pipeline_mode<synchronous>, transform_indices = @transform_3, window_bounds = array<i64: 128, 4>}, {pipeline_mode = #tpu.pipeline_mode<synchronous>, transform_indices = @transform_4, window_bounds = array<i64: 128, 1>}, {pipeline_mode = #tpu.pipeline_mode<synchronous>, transform_indices = @transform_5, window_bounds = array<i64: 128, 128>}, {pipeline_mode = #tpu.pipeline_mode<synchronous>, transform_indices = @transform_6, window_bounds = array<i64: 128, 1>}, {pipeline_mode = #tpu.pipeline_mode<synchronous>, transform_indices = @transform_7, window_bounds = array<i64: 1, 128>}, {transform_indices = @transform_8, window_bounds = array<i64: 1, 1>}, {transform_indices = @transform_9, window_bounds = array<i64: 1, 128>}]} {
    %c0 = arith.constant 0 : index
    %c0_0 = arith.constant 0 : index
    %0 = vector.load %arg3[%c0, %c0_0] : memref<128x12xf32, #tpu.memory_space<vmem>>, vector<128x12xf32>
    %c0_1 = arith.constant 0 : index
    %c0_2 = arith.constant 0 : index
    %1 = vector.load %arg1[%c0_1, %c0_2] : memref<12x128xf32, #tpu.memory_space<vmem>>, vector<12x128xf32>
    %cst = arith.constant dense<0.000000e+00> : vector<128x128xf32>
    %2 = tpu.matmul %0, %1, %cst {dimension_numbers = #tpu.dot_dimension_numbers<[1], [0], [0], [1], [0, 0, 1, 1], [], []>} : vector<128x12xf32>, vector<12x128xf32>, vector<128x128xf32> -> vector<128x128xf32>
    %c0_3 = arith.constant 0 : index
    %c0_4 = arith.constant 0 : index
    %3 = vector.load %arg4[%c0_3, %c0_4] : memref<128x4xf32, #tpu.memory_space<vmem>>, vector<128x4xf32>
    %c0_5 = arith.constant 0 : index
    %c0_6 = arith.constant 0 : index
    %4 = vector.load %arg2[%c0_5, %c0_6] : memref<4x128xf32, #tpu.memory_space<vmem>>, vector<4x128xf32>
    %cst_7 = arith.constant dense<0.000000e+00> : vector<128x128xf32>
    %5 = tpu.matmul %3, %4, %cst_7 {dimension_numbers = #tpu.dot_dimension_numbers<[1], [0], [0], [1], [0, 0, 1, 1], [], []>} : vector<128x4xf32>, vector<4x128xf32>, vector<128x128xf32> -> vector<128x128xf32>
    %6 = arith.addf %2, %5 : vector<128x128xf32>
    %c0_8 = arith.constant 0 : index
    %c0_9 = arith.constant 0 : index
    %7 = vector.load %arg5[%c0_8, %c0_9] : memref<128x1xf32, #tpu.memory_space<vmem>>, vector<128x1xf32>
    %8 = vector.broadcast %7 : vector<128x1xf32> to vector<128x128xf32>
    %9 = arith.addf %6, %8 : vector<128x128xf32>
    %10 = math.tanh %9 : vector<128x128xf32>
    %c0_10 = arith.constant 0 : index
    %c0_11 = arith.constant 0 : index
    %11 = vector.load %arg6[%c0_10, %c0_11] : memref<128x128xf32, #tpu.memory_space<vmem>>, vector<128x128xf32>
    %cst_12 = arith.constant dense<0.000000e+00> : vector<128x128xf32>
    %12 = tpu.matmul %11, %10, %cst_12 {dimension_numbers = #tpu.dot_dimension_numbers<[1], [0], [0], [1], [0, 0, 1, 1], [], []>} : vector<128x128xf32>, vector<128x128xf32>, vector<128x128xf32> -> vector<128x128xf32>
    %c0_13 = arith.constant 0 : index
    %c0_14 = arith.constant 0 : index
    %13 = vector.load %arg7[%c0_13, %c0_14] : memref<128x1xf32, #tpu.memory_space<vmem>>, vector<128x1xf32>
    %14 = vector.broadcast %13 : vector<128x1xf32> to vector<128x128xf32>
    %15 = arith.addf %12, %14 : vector<128x128xf32>
    %16 = math.tanh %15 : vector<128x128xf32>
    %c0_15 = arith.constant 0 : index
    %c0_16 = arith.constant 0 : index
    %17 = vector.load %arg8[%c0_15, %c0_16] : memref<1x128xf32, #tpu.memory_space<vmem>>, vector<1x128xf32>
    %cst_17 = arith.constant dense<0.000000e+00> : vector<1x128xf32>
    %18 = tpu.matmul %17, %16, %cst_17 {dimension_numbers = #tpu.dot_dimension_numbers<[1], [0], [0], [1], [0, 0, 1, 1], [], []>} : vector<1x128xf32>, vector<128x128xf32>, vector<1x128xf32> -> vector<1x128xf32>
    %c0_18 = arith.constant 0 : index
    %c0_19 = arith.constant 0 : index
    %19 = memref.load %arg9[%c0_18, %c0_19] : memref<1x1xf32, #tpu.memory_space<smem>>
    %20 = vector.broadcast %19 : f32 to vector<1x128xf32>
    %21 = arith.addf %18, %20 : vector<1x128xf32>
    %c0_20 = arith.constant 0 : index
    %c0_21 = arith.constant 0 : index
    %22 = vector.load %arg10[%c0_20, %c0_21] : memref<1x128xf32, #tpu.memory_space<vmem>>, vector<1x128xf32>
    tpu.vector_store %arg10[%c0_20, %c0_21], %21 {strides = array<i32>} : memref<1x128xf32, #tpu.memory_space<vmem>>, vector<1x128xf32>,
    return
  }
  func.func @transform_0(%arg0: i32) -> (i32, i32) {
    %c0_i32 = arith.constant 0 : i32
    %c0_i32_0 = arith.constant 0 : i32
    return %c0_i32, %arg0 : i32, i32
  }
  func.func @transform_1(%arg0: i32) -> (i32, i32) {
    %c0_i32 = arith.constant 0 : i32
    %c0_i32_0 = arith.constant 0 : i32
    return %c0_i32, %arg0 : i32, i32
  }
  func.func @transform_2(%arg0: i32) -> (i32, i32) {
    %c0_i32 = arith.constant 0 : i32
    %c0_i32_0 = arith.constant 0 : i32
    %c0_i32_1 = arith.constant 0 : i32
    return %c0_i32, %c0_i32_0 : i32, i32
  }
  func.func @transform_3(%arg0: i32) -> (i32, i32) {
    %c0_i32 = arith.constant 0 : i32
    %c0_i32_0 = arith.constant 0 : i32
    %c0_i32_1 = arith.constant 0 : i32
    return %c0_i32, %c0_i32_0 : i32, i32
  }
  func.func @transform_4(%arg0: i32) -> (i32, i32) {
    %c0_i32 = arith.constant 0 : i32
    %c0_i32_0 = arith.constant 0 : i32
    %c0_i32_1 = arith.constant 0 : i32
    return %c0_i32, %c0_i32_0 : i32, i32
  }
  func.func @transform_5(%arg0: i32) -> (i32, i32) {
    %c0_i32 = arith.constant 0 : i32
    %c0_i32_0 = arith.constant 0 : i32
    %c0_i32_1 = arith.constant 0 : i32
    return %c0_i32, %c0_i32_0 : i32, i32
  }
  func.func @transform_6(%arg0: i32) -> (i32, i32) {
    %c0_i32 = arith.constant 0 : i32
    %c0_i32_0 = arith.constant 0 : i32
    %c0_i32_1 = arith.constant 0 : i32
    return %c0_i32, %c0_i32_0 : i32, i32
  }
  func.func @transform_7(%arg0: i32) -> (i32, i32) {
    %c0_i32 = arith.constant 0 : i32
    %c0_i32_0 = arith.constant 0 : i32
    %c0_i32_1 = arith.constant 0 : i32
    return %c0_i32, %c0_i32_0 : i32, i32
  }
  func.func @transform_8(%arg0: i32) -> (i32, i32) {
    %c0_i32 = arith.constant 0 : i32
    %c0_i32_0 = arith.constant 0 : i32
    %c0_i32_1 = arith.constant 0 : i32
    return %c0_i32, %c0_i32_0 : i32, i32
  }
  func.func @transform_9(%arg0: i32) -> (i32, i32) {
    %c0_i32 = arith.constant 0 : i32
    %c0_i32_0 = arith.constant 0 : i32
    return %c0_i32, %arg0 : i32, i32
  }
}

</mosaic_0001>

<llo_original>
// kernel: q_value.1
$region0: #{q_value.1}
  #allocation0 [shape = 'u32[]', space=smem, size = 0x4, offset = 0x4, fixed_abs, tag = 'smem constant byte address 0x4 - core index']
  #allocation1 [shape = 'u32[72,128]{1,0:T(1,128)}', space=vmem, size = 0x9000, scoped, tag = 'internal scratch']
  #allocation2 [shape = 'f32[1,1]{1,0:T(1,128)S(6)}', space=smem, size = 0x200, scoped, tag = 'scoped memory for q_value.1']
  %s0 = inlined_call_operand.vmem [shape: f32[12,128], index: 0, kind: input, shape index: {}]
  %s1 = inlined_call_operand.vmem [shape: f32[4,128], index: 1, kind: input, shape index: {}]
  %s2 = inlined_call_operand.vmem [shape: f32[128,12], index: 2, kind: input, shape index: {}]
  %s3 = inlined_call_operand.vmem [shape: f32[128,4], index: 3, kind: input, shape index: {}]
  %s4 = inlined_call_operand.vmem [shape: f32[128,1], index: 4, kind: input, shape index: {}]
  %s5 = inlined_call_operand.vmem [shape: f32[128,128], index: 5, kind: input, shape index: {}]
  %s6 = inlined_call_operand.vmem [shape: f32[128,1], index: 6, kind: input, shape index: {}]
  %s7 = inlined_call_operand.vmem [shape: f32[1,128], index: 7, kind: input, shape index: {}]
  %s8 = inlined_call_operand.<no memory space> [shape: f32[1,1], index: 8, kind: input, shape index: {}]
  %s9 = inlined_call_operand.vmem [shape: f32[1,128], index: 9, kind: output, shape index: {}]
  %s10 = sld [smem:[#allocation0]]
  $region46: #{q_value.1} parent=0
    _
  %s12 = ssub.s32 1, %s10
  %s13 = scalar_select 0, %s12, %s10
  %14 = sst [smem:[#allocation2]] %s8
  // Predicated region
  $region2: #{q_value.1} parent=0 // pred_check
    _
  $region3: #{q_value.1} parent=0 // pred_check_branch
    %16 = sbr.rel (0) target = $region5
  $region4: #{q_value.1} parent=0 // pred_region
    _
  $region5: #{q_value.1} parent=0 // pred_fallthru
    _
  // Predicated region
  $region6: #{q_value.1} parent=0 // pred_check
    _
  $region7: #{q_value.1} parent=0 // pred_check_branch
    %18 = sbr.rel (0) target = $region9
  $region8: #{q_value.1} parent=0 // pred_region
    _
  $region9: #{q_value.1} parent=0 // pred_fallthru
    _
  // Predicated region
  $region10: #{q_value.1} parent=0 // pred_check
    _
  $region11: #{q_value.1} parent=0 // pred_check_branch
    %20 = sbr.rel (0) target = $region13
  $region12: #{q_value.1} parent=0 // pred_region
    _
  $region13: #{q_value.1} parent=0 // pred_fallthru
    _
  // Predicated region
  $region14: #{q_value.1} parent=0 // pred_check
    _
  $region15: #{q_value.1} parent=0 // pred_check_branch
    %22 = sbr.rel (0) target = $region17
  $region16: #{q_value.1} parent=0 // pred_region
    _
  $region17: #{q_value.1} parent=0 // pred_fallthru
    _
  // Predicated region
  $region18: #{q_value.1} parent=0 // pred_check
    _
  $region19: #{q_value.1} parent=0 // pred_check_branch
    %24 = sbr.rel (0) target = $region21
  $region20: #{q_value.1} parent=0 // pred_region
    _
  $region21: #{q_value.1} parent=0 // pred_fallthru
    _
  // Predicated region
  $region22: #{q_value.1} parent=0 // pred_check
    _
  $region23: #{q_value.1} parent=0 // pred_check_branch
    %26 = sbr.rel (0) target = $region25
  $region24: #{q_value.1} parent=0 // pred_region
    _
  $region25: #{q_value.1} parent=0 // pred_fallthru
    _
  // Predicated region
  $region26: #{q_value.1} parent=0 // pred_check
    _
  $region27: #{q_value.1} parent=0 // pred_check_branch
    %28 = sbr.rel (0) target = $region29
  $region28: #{q_value.1} parent=0 // pred_region
    _
  $region29: #{q_value.1} parent=0 // pred_fallthru
    _
  // Predicated region
  $region30: #{q_value.1} parent=0 // pred_check
    _
  $region31: #{q_value.1} parent=0 // pred_check_branch
    %30 = sbr.rel (0) target = $region33
  $region32: #{q_value.1} parent=0 // pred_region
    _
  $region33: #{q_value.1} parent=0 // pred_fallthru
    _
  // Predicated region
  $region34: #{q_value.1} parent=0 // pred_check
    _
  $region35: #{q_value.1} parent=0 // pred_check_branch
    %32 = sbr.rel (0) target = $region37
  $region36: #{q_value.1} parent=0 // pred_region
    _
  $region37: #{q_value.1} parent=0 // pred_fallthru
    _
  %v33 = vld [vmem:[%s2] sm:$0xff]
  %v34 = vld [vmem:[%s2 + $0x8] sm:$0xff]
  %v35 = vld [vmem:[%s2 + $0x10] sm:$0xff]
  %v36 = vld [vmem:[%s2 + $0x18] sm:$0xff]
  %v37 = vld [vmem:[%s2 + $0x20] sm:$0xff]
  %v38 = vld [vmem:[%s2 + $0x28] sm:$0xff]
  %v39 = vld [vmem:[%s2 + $0x30] sm:$0xff]
  %v40 = vld [vmem:[%s2 + $0x38] sm:$0xff]
  %v41 = vld [vmem:[%s2 + $0x40] sm:$0xff]
  %v42 = vld [vmem:[%s2 + $0x48] sm:$0xff]
  %v43 = vld [vmem:[%s2 + $0x50] sm:$0xff]
  %v44 = vld [vmem:[%s2 + $0x58] sm:$0xff]
  %v45 = vld [vmem:[%s2 + $0x60] sm:$0xff]
  %v46 = vld [vmem:[%s2 + $0x68] sm:$0xff]
  %v47 = vld [vmem:[%s2 + $0x70] sm:$0xff]
  %v48 = vld [vmem:[%s2 + $0x78] sm:$0xff]
  %v49 = vld [vmem:[%s0] sm:$0xff]
  %v50 = vld [vmem:[%s0 + $0x8] sm:$0xf]
  %v51 = vld [vmem:[%s3] sm:$0xff]
  %v52 = vld [vmem:[%s3 + $0x8] sm:$0xff]
  %v53 = vld [vmem:[%s3 + $0x10] sm:$0xff]
  %v54 = vld [vmem:[%s3 + $0x18] sm:$0xff]
  %v55 = vld [vmem:[%s3 + $0x20] sm:$0xff]
  %v56 = vld [vmem:[%s3 + $0x28] sm:$0xff]
  %v57 = vld [vmem:[%s3 + $0x30] sm:$0xff]
  %v58 = vld [vmem:[%s3 + $0x38] sm:$0xff]
  %v59 = vld [vmem:[%s3 + $0x40] sm:$0xff]
  %v60 = vld [vmem:[%s3 + $0x48] sm:$0xff]
  %v61 = vld [vmem:[%s3 + $0x50] sm:$0xff]
  %v62 = vld [vmem:[%s3 + $0x58] sm:$0xff]
  %v63 = vld [vmem:[%s3 + $0x60] sm:$0xff]
  %v64 = vld [vmem:[%s3 + $0x68] sm:$0xff]
  %v65 = vld [vmem:[%s3 + $0x70] sm:$0xff]
  %v66 = vld [vmem:[%s3 + $0x78] sm:$0xff]
  %v67 = vld [vmem:[%s1] sm:$0xf]
  %vm68 = vcmask 31744
  %v70 = vsel %vm68, %v51, 0
  %v73 = vsel %vm68, %v52, 0
  %v76 = vsel %vm68, %v53, 0
  %v79 = vsel %vm68, %v54, 0
  %v82 = vsel %vm68, %v55, 0
  %v85 = vsel %vm68, %v56, 0
  %v88 = vsel %vm68, %v57, 0
  %v91 = vsel %vm68, %v58, 0
  %v94 = vsel %vm68, %v59, 0
  %v97 = vsel %vm68, %v60, 0
  %v100 = vsel %vm68, %v61, 0
  %v103 = vsel %vm68, %v62, 0
  %v106 = vsel %vm68, %v63, 0
  %v109 = vsel %vm68, %v64, 0
  %v112 = vsel %vm68, %v65, 0
  %v115 = vsel %vm68, %v66, 0
  %vm117 = vcmask 1043456
  %v119 = vsel %vm117, %v67, 0
  %121 = vmatpush.msra.mxu0 0.0
  %122 = vmatpush.msra.mxu0 0.0
  %123 = vmatpush.msra.mxu0 0.0
  %124 = vmatpush.msra.mxu0 0.0
  %125 = vmatpush.msra.mxu0 0.0
  %126 = vmatpush.msra.mxu0 0.0
  %127 = vmatpush.msra.mxu0 0.0
  %128 = vmatpush.msra.mxu0 0.0
  %129 = vmatpush.msra.mxu0 0.0
  %130 = vmatpush.msra.mxu0 0.0
  %131 = vmatpush.msra.mxu0 0.0
  %132 = vmatpush.msra.mxu0 0.0
  %133 = vmatpush.msra.mxu0 0.0
  %134 = vmatpush.msra.mxu0 0.0
  %135 = vmatpush.msra.mxu0 0.0
  %136 = vmatpush.msra.mxu0 %v119
  %137 = vmatmul.f32.gmra.mxu0 %v70
  %v138 = vpop.f32.mrf.mxu0
  %v139 = vadd.f32 0.0, %v138
  %140 = vmatmul.f32.gmra.mxu0 %v73
  %v141 = vpop.f32.mrf.mxu0
  %v142 = vadd.f32 0.0, %v141
  %143 = vmatmul.f32.gmra.mxu0 %v76
  %v144 = vpop.f32.mrf.mxu0
  %v145 = vadd.f32 0.0, %v144
  %146 = vmatmul.f32.gmra.mxu0 %v79
  %v147 = vpop.f32.mrf.mxu0
  %v148 = vadd.f32 0.0, %v147
  %149 = vmatmul.f32.gmra.mxu0 %v82
  %v150 = vpop.f32.mrf.mxu0
  %v151 = vadd.f32 0.0, %v150
  %152 = vmatmul.f32.gmra.mxu0 %v85
  %v153 = vpop.f32.mrf.mxu0
  %v154 = vadd.f32 0.0, %v153
  %155 = vmatmul.f32.gmra.mxu0 %v88
  %v156 = vpop.f32.mrf.mxu0
  %v157 = vadd.f32 0.0, %v156
  %158 = vmatmul.f32.gmra.mxu0 %v91
  %v159 = vpop.f32.mrf.mxu0
  %v160 = vadd.f32 0.0, %v159
  %161 = vmatmul.f32.gmra.mxu0 %v94
  %v162 = vpop.f32.mrf.mxu0
  %v163 = vadd.f32 0.0, %v162
  %164 = vmatmul.f32.gmra.mxu0 %v97
  %v165 = vpop.f32.mrf.mxu0
  %v166 = vadd.f32 0.0, %v165
  %167 = vmatmul.f32.gmra.mxu0 %v100
  %v168 = vpop.f32.mrf.mxu0
  %v169 = vadd.f32 0.0, %v168
  %170 = vmatmul.f32.gmra.mxu0 %v103
  %v171 = vpop.f32.mrf.mxu0
  %v172 = vadd.f32 0.0, %v171
  %173 = vmatmul.f32.gmra.mxu0 %v106
  %v174 = vpop.f32.mrf.mxu0
  %v175 = vadd.f32 0.0, %v174
  %176 = vmatmul.f32.gmra.mxu0 %v109
  %v177 = vpop.f32.mrf.mxu0
  %v178 = vadd.f32 0.0, %v177
  %179 = vmatmul.f32.gmra.mxu0 %v112
  %v180 = vpop.f32.mrf.mxu0
  %v181 = vadd.f32 0.0, %v180
  %182 = vmatmul.f32.gmra.mxu0 %v115
  %v183 = vpop.f32.mrf.mxu0
  %v184 = vadd.f32 0.0, %v183
  %185 = vdwg.mxu0
  %vm186 = vcmask 97280
  %v188 = vsel %vm186, %v33, 0
  %v191 = vsel %vm186, %v34, 0
  %v194 = vsel %vm186, %v35, 0
  %v197 = vsel %vm186, %v36, 0
  %v200 = vsel %vm186, %v37, 0
  %v203 = vsel %vm186, %v38, 0
  %v206 = vsel %vm186, %v39, 0
  %v209 = vsel %vm186, %v40, 0
  %v212 = vsel %vm186, %v41, 0
  %v215 = vsel %vm186, %v42, 0
  %v218 = vsel %vm186, %v43, 0
  %v221 = vsel %vm186, %v44, 0
  %v224 = vsel %vm186, %v45, 0
  %v227 = vsel %vm186, %v46, 0
  %v230 = vsel %vm186, %v47, 0
  %v233 = vsel %vm186, %v48, 0
  %v236 = vsel %vm117, %v50, 0
  %238 = vmatpush.msra.mxu0 0.0
  %239 = vmatpush.msra.mxu0 0.0
  %240 = vmatpush.msra.mxu0 0.0
  %241 = vmatpush.msra.mxu0 0.0
  %242 = vmatpush.msra.mxu0 0.0
  %243 = vmatpush.msra.mxu0 0.0
  %244 = vmatpush.msra.mxu0 0.0
  %245 = vmatpush.msra.mxu0 0.0
  %246 = vmatpush.msra.mxu0 0.0
  %247 = vmatpush.msra.mxu0 0.0
  %248 = vmatpush.msra.mxu0 0.0
  %249 = vmatpush.msra.mxu0 0.0
  %250 = vmatpush.msra.mxu0 0.0
  %251 = vmatpush.msra.mxu0 0.0
  %252 = vmatpush.msra.mxu0 %v236
  %253 = vmatpush.msra.mxu0 %v49
  %254 = vmatmul.f32.gmra.mxu0 %v188
  %v255 = vpop.f32.mrf.mxu0
  %v256 = vadd.f32 %v139, %v255
  %257 = vmatmul.f32.gmra.mxu0 %v191
  %v258 = vpop.f32.mrf.mxu0
  %v259 = vadd.f32 %v142, %v258
  %260 = vmatmul.f32.gmra.mxu0 %v194
  %v261 = vpop.f32.mrf.mxu0
  %v262 = vadd.f32 %v145, %v261
  %263 = vmatmul.f32.gmra.mxu0 %v197
  %v264 = vpop.f32.mrf.mxu0
  %v265 = vadd.f32 %v148, %v264
  %266 = vmatmul.f32.gmra.mxu0 %v200
  %v267 = vpop.f32.mrf.mxu0
  %v268 = vadd.f32 %v151, %v267
  %269 = vmatmul.f32.gmra.mxu0 %v203
  %v270 = vpop.f32.mrf.mxu0
  %v271 = vadd.f32 %v154, %v270
  %272 = vmatmul.f32.gmra.mxu0 %v206
  %v273 = vpop.f32.mrf.mxu0
  %v274 = vadd.f32 %v157, %v273
  %275 = vmatmul.f32.gmra.mxu0 %v209
  %v276 = vpop.f32.mrf.mxu0
  %v277 = vadd.f32 %v160, %v276
  %278 = vmatmul.f32.gmra.mxu0 %v212
  %v279 = vpop.f32.mrf.mxu0
  %v280 = vadd.f32 %v163, %v279
  %281 = vmatmul.f32.gmra.mxu0 %v215
  %v282 = vpop.f32.mrf.mxu0
  %v283 = vadd.f32 %v166, %v282
  %284 = vmatmul.f32.gmra.mxu0 %v218
  %v285 = vpop.f32.mrf.mxu0
  %v286 = vadd.f32 %v169, %v285
  %287 = vmatmul.f32.gmra.mxu0 %v221
  %v288 = vpop.f32.mrf.mxu0
  %v289 = vadd.f32 %v172, %v288
  %290 = vmatmul.f32.gmra.mxu0 %v224
  %v291 = vpop.f32.mrf.mxu0
  %v292 = vadd.f32 %v175, %v291
  %293 = vmatmul.f32.gmra.mxu0 %v227
  %v294 = vpop.f32.mrf.mxu0
  %v295 = vadd.f32 %v178, %v294
  %296 = vmatmul.f32.gmra.mxu0 %v230
  %v297 = vpop.f32.mrf.mxu0
  %v298 = vadd.f32 %v181, %v297
  %299 = vmatmul.f32.gmra.mxu0 %v233
  %v300 = vpop.f32.mrf.mxu0
  %v301 = vadd.f32 %v184, %v300
  %302 = vdwg.mxu0
  %v303 = vld [vmem:[%s4] sm:$0xff]
  %v304 = vld [vmem:[%s4 + $0x8] sm:$0xff]
  %v305 = vld [vmem:[%s4 + $0x10] sm:$0xff]
  %v306 = vld [vmem:[%s4 + $0x18] sm:$0xff]
  %v307 = vld [vmem:[%s4 + $0x20] sm:$0xff]
  %v308 = vld [vmem:[%s4 + $0x28] sm:$0xff]
  %v309 = vld [vmem:[%s4 + $0x30] sm:$0xff]
  %v310 = vld [vmem:[%s4 + $0x38] sm:$0xff]
  %v311 = vld [vmem:[%s4 + $0x40] sm:$0xff]
  %v312 = vld [vmem:[%s4 + $0x48] sm:$0xff]
  %v313 = vld [vmem:[%s4 + $0x50] sm:$0xff]
  %v314 = vld [vmem:[%s4 + $0x58] sm:$0xff]
  %v315 = vld [vmem:[%s4 + $0x60] sm:$0xff]
  %v316 = vld [vmem:[%s4 + $0x68] sm:$0xff]
  %v317 = vld [vmem:[%s4 + $0x70] sm:$0xff]
  %v318 = vld [vmem:[%s4 + $0x78] sm:$0xff]
  %320 = vset.pattern.permute.xlu0 0
  %321 = vperm.xlu0 %320, %v303
  %v322 = vpop.permute.xlu0 %321
  %325 = vset.pattern.permute.xlu0 0
  %326 = vperm.xlu0 %325, %v304
  %v327 = vpop.permute.xlu0 %326
  %330 = vset.pattern.permute.xlu0 0
  %331 = vperm.xlu0 %330, %v305
  %v332 = vpop.permute.xlu0 %331
  %335 = vset.pattern.permute.xlu0 0
  %336 = vperm.xlu0 %335, %v306
  %v337 = vpop.permute.xlu0 %336
  %340 = vset.pattern.permute.xlu0 0
  %341 = vperm.xlu0 %340, %v307
  %v342 = vpop.permute.xlu0 %341
  %345 = vset.pattern.permute.xlu0 0
  %346 = vperm.xlu0 %345, %v308
  %v347 = vpop.permute.xlu0 %346
  %350 = vset.pattern.permute.xlu0 0
  %351 = vperm.xlu0 %350, %v309
  %v352 = vpop.permute.xlu0 %351
  %355 = vset.pattern.permute.xlu0 0
  %356 = vperm.xlu0 %355, %v310
  %v357 = vpop.permute.xlu0 %356
  %360 = vset.pattern.permute.xlu0 0
  %361 = vperm.xlu0 %360, %v311
  %v362 = vpop.permute.xlu0 %361
  %365 = vset.pattern.permute.xlu0 0
  %366 = vperm.xlu0 %365, %v312
  %v367 = vpop.permute.xlu0 %366
  %370 = vset.pattern.permute.xlu0 0
  %371 = vperm.xlu0 %370, %v313
  %v372 = vpop.permute.xlu0 %371
  %375 = vset.pattern.permute.xlu0 0
  %376 = vperm.xlu0 %375, %v314
  %v377 = vpop.permute.xlu0 %376
  %380 = vset.pattern.permute.xlu0 0
  %381 = vperm.xlu0 %380, %v315
  %v382 = vpop.permute.xlu0 %381
  %385 = vset.pattern.permute.xlu0 0
  %386 = vperm.xlu0 %385, %v316
  %v387 = vpop.permute.xlu0 %386
  %390 = vset.pattern.permute.xlu0 0
  %391 = vperm.xlu0 %390, %v317
  %v392 = vpop.permute.xlu0 %391
  %395 = vset.pattern.permute.xlu0 0
  %396 = vperm.xlu0 %395, %v318
  %v397 = vpop.permute.xlu0 %396
  %v399 = vadd.f32 %v256, %v322
  %v400 = vadd.f32 %v259, %v327
  %v401 = vadd.f32 %v262, %v332
  %v402 = vadd.f32 %v265, %v337
  %v403 = vadd.f32 %v268, %v342
  %v404 = vadd.f32 %v271, %v347
  %v405 = vadd.f32 %v274, %v352
  %v406 = vadd.f32 %v277, %v357
  %v407 = vadd.f32 %v280, %v362
  %v408 = vadd.f32 %v283, %v367
  %v409 = vadd.f32 %v286, %v372
  %v410 = vadd.f32 %v289, %v377
  %v411 = vadd.f32 %v292, %v382
  %v412 = vadd.f32 %v295, %v387
  %v413 = vadd.f32 %v298, %v392
  %v414 = vadd.f32 %v301, %v397
  %v415 = vtanh.pop %v399
  %v416 = vtanh.pop %v400
  %v417 = vtanh.pop %v401
  %v418 = vtanh.pop %v402
  %v419 = vtanh.pop %v403
  %v420 = vtanh.pop %v404
  %v421 = vtanh.pop %v405
  %v422 = vtanh.pop %v406
  %v423 = vtanh.pop %v407
  %v424 = vtanh.pop %v408
  %v425 = vtanh.pop %v409
  %v426 = vtanh.pop %v410
  %v427 = vtanh.pop %v411
  %v428 = vtanh.pop %v412
  %v429 = vtanh.pop %v413
  %v430 = vtanh.pop %v414
  %v431 = vld [vmem:[%s5] sm:$0xff]
  %v432 = vld [vmem:[%s5 + $0x8] sm:$0xff]
  %v433 = vld [vmem:[%s5 + $0x10] sm:$0xff]
  %v434 = vld [vmem:[%s5 + $0x18] sm:$0xff]
  %v435 = vld [vmem:[%s5 + $0x20] sm:$0xff]
  %v436 = vld [vmem:[%s5 + $0x28] sm:$0xff]
  %v437 = vld [vmem:[%s5 + $0x30] sm:$0xff]
  %v438 = vld [vmem:[%s5 + $0x38] sm:$0xff]
  %v439 = vld [vmem:[%s5 + $0x40] sm:$0xff]
  %v440 = vld [vmem:[%s5 + $0x48] sm:$0xff]
  %v441 = vld [vmem:[%s5 + $0x50] sm:$0xff]
  %v442 = vld [vmem:[%s5 + $0x58] sm:$0xff]
  %v443 = vld [vmem:[%s5 + $0x60] sm:$0xff]
  %v444 = vld [vmem:[%s5 + $0x68] sm:$0xff]
  %v445 = vld [vmem:[%s5 + $0x70] sm:$0xff]
  %v446 = vld [vmem:[%s5 + $0x78] sm:$0xff]
  %v447 = vld [vmem:[%s6] sm:$0xff]
  %v448 = vld [vmem:[%s6 + $0x8] sm:$0xff]
  %v449 = vld [vmem:[%s6 + $0x10] sm:$0xff]
  %v450 = vld [vmem:[%s6 + $0x18] sm:$0xff]
  %v451 = vld [vmem:[%s6 + $0x20] sm:$0xff]
  %v452 = vld [vmem:[%s6 + $0x28] sm:$0xff]
  %v453 = vld [vmem:[%s6 + $0x30] sm:$0xff]
  %v454 = vld [vmem:[%s6 + $0x38] sm:$0xff]
  %v455 = vld [vmem:[%s6 + $0x40] sm:$0xff]
  %v456 = vld [vmem:[%s6 + $0x48] sm:$0xff]
  %v457 = vld [vmem:[%s6 + $0x50] sm:$0xff]
  %v458 = vld [vmem:[%s6 + $0x58] sm:$0xff]
  %v459 = vld [vmem:[%s6 + $0x60] sm:$0xff]
  %v460 = vld [vmem:[%s6 + $0x68] sm:$0xff]
  %v461 = vld [vmem:[%s6 + $0x70] sm:$0xff]
  %v462 = vld [vmem:[%s6 + $0x78] sm:$0xff]
  %464 = vset.pattern.permute.xlu0 0
  %465 = vperm.xlu0 %464, %v447
  %v466 = vpop.permute.xlu0 %465
  %469 = vset.pattern.permute.xlu0 0
  %470 = vperm.xlu0 %469, %v448
  %v471 = vpop.permute.xlu0 %470
  %474 = vset.pattern.permute.xlu0 0
  %475 = vperm.xlu0 %474, %v449
  %v476 = vpop.permute.xlu0 %475
  %479 = vset.pattern.permute.xlu0 0
  %480 = vperm.xlu0 %479, %v450
  %v481 = vpop.permute.xlu0 %480
  %484 = vset.pattern.permute.xlu0 0
  %485 = vperm.xlu0 %484, %v451
  %v486 = vpop.permute.xlu0 %485
  %489 = vset.pattern.permute.xlu0 0
  %490 = vperm.xlu0 %489, %v452
  %v491 = vpop.permute.xlu0 %490
  %494 = vset.pattern.permute.xlu0 0
  %495 = vperm.xlu0 %494, %v453
  %v496 = vpop.permute.xlu0 %495
  %499 = vset.pattern.permute.xlu0 0
  %500 = vperm.xlu0 %499, %v454
  %v501 = vpop.permute.xlu0 %500
  %504 = vset.pattern.permute.xlu0 0
  %505 = vperm.xlu0 %504, %v455
  %v506 = vpop.permute.xlu0 %505
  %509 = vset.pattern.permute.xlu0 0
  %510 = vperm.xlu0 %509, %v456
  %v511 = vpop.permute.xlu0 %510
  %514 = vset.pattern.permute.xlu0 0
  %515 = vperm.xlu0 %514, %v457
  %v516 = vpop.permute.xlu0 %515
  %519 = vset.pattern.permute.xlu0 0
  %520 = vperm.xlu0 %519, %v458
  %v521 = vpop.permute.xlu0 %520
  %524 = vset.pattern.permute.xlu0 0
  %525 = vperm.xlu0 %524, %v459
  %v526 = vpop.permute.xlu0 %525
  %529 = vset.pattern.permute.xlu0 0
  %530 = vperm.xlu0 %529, %v460
  %v531 = vpop.permute.xlu0 %530
  %534 = vset.pattern.permute.xlu0 0
  %535 = vperm.xlu0 %534, %v461
  %v536 = vpop.permute.xlu0 %535
  %539 = vset.pattern.permute.xlu0 0
  %540 = vperm.xlu0 %539, %v462
  %v541 = vpop.permute.xlu0 %540
  %543 = vmatpush.msra.mxu0 %v430
  %544 = vmatpush.msra.mxu0 %v429
  %545 = vmatpush.msra.mxu0 %v428
  %546 = vmatpush.msra.mxu0 %v427
  %547 = vmatpush.msra.mxu0 %v426
  %548 = vmatpush.msra.mxu0 %v425
  %549 = vmatpush.msra.mxu0 %v424
  %550 = vmatpush.msra.mxu0 %v423
  %551 = vmatpush.msra.mxu0 %v422
  %552 = vmatpush.msra.mxu0 %v421
  %553 = vmatpush.msra.mxu0 %v420
  %554 = vmatpush.msra.mxu0 %v419
  %555 = vmatpush.msra.mxu0 %v418
  %556 = vmatpush.msra.mxu0 %v417
  %557 = vmatpush.msra.mxu0 %v416
  %558 = vmatpush.msra.mxu0 %v415
  %559 = vmatmul.f32.gmra.mxu0 %v431
  %v560 = vpop.f32.mrf.mxu0
  %v561 = vadd.f32 %v466, %v560
  %562 = vmatmul.f32.gmra.mxu0 %v432
  %v563 = vpop.f32.mrf.mxu0
  %v564 = vadd.f32 %v471, %v563
  %565 = vmatmul.f32.gmra.mxu0 %v433
  %v566 = vpop.f32.mrf.mxu0
  %v567 = vadd.f32 %v476, %v566
  %568 = vmatmul.f32.gmra.mxu0 %v434
  %v569 = vpop.f32.mrf.mxu0
  %v570 = vadd.f32 %v481, %v569
  %571 = vmatmul.f32.gmra.mxu0 %v435
  %v572 = vpop.f32.mrf.mxu0
  %v573 = vadd.f32 %v486, %v572
  %574 = vmatmul.f32.gmra.mxu0 %v436
  %v575 = vpop.f32.mrf.mxu0
  %v576 = vadd.f32 %v491, %v575
  %577 = vmatmul.f32.gmra.mxu0 %v437
  %v578 = vpop.f32.mrf.mxu0
  %v579 = vadd.f32 %v496, %v578
  %580 = vmatmul.f32.gmra.mxu0 %v438
  %v581 = vpop.f32.mrf.mxu0
  %v582 = vadd.f32 %v501, %v581
  %583 = vmatmul.f32.gmra.mxu0 %v439
  %v584 = vpop.f32.mrf.mxu0
  %v585 = vadd.f32 %v506, %v584
  %586 = vmatmul.f32.gmra.mxu0 %v440
  %v587 = vpop.f32.mrf.mxu0
  %v588 = vadd.f32 %v511, %v587
  %589 = vmatmul.f32.gmra.mxu0 %v441
  %v590 = vpop.f32.mrf.mxu0
  %v591 = vadd.f32 %v516, %v590
  %592 = vmatmul.f32.gmra.mxu0 %v442
  %v593 = vpop.f32.mrf.mxu0
  %v594 = vadd.f32 %v521, %v593
  %595 = vmatmul.f32.gmra.mxu0 %v443
  %v596 = vpop.f32.mrf.mxu0
  %v597 = vadd.f32 %v526, %v596
  %598 = vmatmul.f32.gmra.mxu0 %v444
  %v599 = vpop.f32.mrf.mxu0
  %v600 = vadd.f32 %v531, %v599
  %601 = vmatmul.f32.gmra.mxu0 %v445
  %v602 = vpop.f32.mrf.mxu0
  %v603 = vadd.f32 %v536, %v602
  %604 = vmatmul.f32.gmra.mxu0 %v446
  %v605 = vpop.f32.mrf.mxu0
  %v606 = vadd.f32 %v541, %v605
  %607 = vdwg.mxu0
  %v608 = vtanh.pop %v561
  %v609 = vtanh.pop %v564
  %v610 = vtanh.pop %v567
  %v611 = vtanh.pop %v570
  %v612 = vtanh.pop %v573
  %v613 = vtanh.pop %v576
  %v614 = vtanh.pop %v579
  %v615 = vtanh.pop %v582
  %v616 = vtanh.pop %v585
  %v617 = vtanh.pop %v588
  %v618 = vtanh.pop %v591
  %v619 = vtanh.pop %v594
  %v620 = vtanh.pop %v597
  %v621 = vtanh.pop %v600
  %v622 = vtanh.pop %v603
  %v623 = vtanh.pop %v606
  %v624 = vld [vmem:[%s7] sm:$0x1]
  %s625 = sld [smem:[#allocation2]]
  %v626 = vstv %s625
  %627 = vmatpush.msra.mxu0 %v623
  %628 = vmatpush.msra.mxu0 %v622
  %629 = vmatpush.msra.mxu0 %v621
  %630 = vmatpush.msra.mxu0 %v620
  %631 = vmatpush.msra.mxu0 %v619
  %632 = vmatpush.msra.mxu0 %v618
  %633 = vmatpush.msra.mxu0 %v617
  %634 = vmatpush.msra.mxu0 %v616
  %635 = vmatpush.msra.mxu0 %v615
  %636 = vmatpush.msra.mxu0 %v614
  %637 = vmatpush.msra.mxu0 %v613
  %638 = vmatpush.msra.mxu0 %v612
  %639 = vmatpush.msra.mxu0 %v611
  %640 = vmatpush.msra.mxu0 %v610
  %641 = vmatpush.msra.mxu0 %v609
  %642 = vmatpush.msra.mxu0 %v608
  %643 = vmatmul.f32.gmra.mxu0 %v624
  %v644 = vpop.f32.mrf.mxu0
  %v645 = vadd.f32 %v626, %v644
  %646 = vdwg.mxu0
  %647 = vst [vmem:[%s9] sm:$0x1] %v645
  // Predicated region
  $region38: #{q_value.1} parent=0 // pred_check
    _
  $region39: #{q_value.1} parent=0 // pred_check_branch
    %649 = sbr.rel (0) target = $region41
  $region40: #{q_value.1} parent=0 // pred_region
    _
  $region41: #{q_value.1} parent=0 // pred_fallthru
    _
  // Predicated region
  $region42: #{q_value.1} parent=0 // pred_check
    _
  $region43: #{q_value.1} parent=0 // pred_check_branch
    %651 = sbr.rel (0) target = $region45
  $region44: #{q_value.1} parent=0 // pred_region
    _
  $region45: #{q_value.1} parent=0 // pred_fallthru
    _

</llo_original>
